<compile_context>
chip_gen: v7x
topology: tpu7x:2x2x1
jax: 0.10.0
libtpu: 0.0.40
codegen_flags: <defaults>
</compile_context>

<pallas_src>
import functools
import math

import jax
import jax.numpy as jnp
from jax.experimental import pallas as pl
from jax.experimental.pallas import tpu as pltpu


def _round_up(x, m):
    return (x + m - 1) // m * m


def _ffm_pair_mul_kernel(l_ref, r_ref, o_ref):
    """One batch tile: elementwise product of the pair-ordered operands.

    l_ref : (TB, Wp)  left operand  -- pair p=(i,j) columns hold emb_j(field i)
    r_ref : (TB, Wp)  right operand -- pair p=(i,j) columns hold emb_i(field j)
    o_ref : (TB, Wp)  interaction products, Wp = P_pad * E (multiple of 128)
    """
    o_ref[...] = (l_ref[...] * r_ref[...]).astype(o_ref.dtype)


def _vmem_budget_and_limit():
    """Per-generation double-buffered block budget + scoped-VMEM limit."""
    try:
        cap = int(pltpu.get_tpu_info().vmem_capacity_bytes)
    except Exception:
        cap = 64 * 1024 * 1024                      # conservative fallback
    budget = max(8 << 20, min(cap // 4, 24 << 20))  # v5e/v6e ~24 MiB, v7x ~16 MiB
    limit = min(cap // 2, budget + (8 << 20))
    return budget, limit


def field_aware_fm(x_idx, tables, offsets, *, tile_batch=4096):
    """FFM forward.

    x_idx   : (B, F) int32   raw per-field categorical indices
    tables  : (F, V, E)      stacked embedding tables, V = sum(field_dims)
    offsets : (F,)  int32    cumulative field offsets
    returns : (B, P, E)      P = F*(F-1)//2, matching the PyTorch module output
    """
    B, F = x_idx.shape
    Ft, V, E = tables.shape
    assert Ft == F and F >= 2
    P = F * (F - 1) // 2
    itemsize = jnp.dtype(tables.dtype).itemsize

    # ---- static pair bookkeeping (same (i, j) order as the PyTorch loop) ----
    pair_i, pair_j = [], []
    for i in range(F - 1):
        for j in range(i + 1, F):
            pair_i.append(i)
            pair_j.append(j)

    # Pad the pair count so the flattened lane width is a multiple of 128
    # (unmasked vector stores); padded pairs point at row 0 and are sliced off.
    step = 128 // math.gcd(E, 128)
    P_pad = _round_up(P, step)
    Wp = P_pad * E

    # ---- tile size from the per-generation VMEM budget ----------------------
    vmem_budget, vmem_limit = _vmem_budget_and_limit()
    bytes_per_row = 2 * 3 * Wp * itemsize           # (l + r + out), double-buffered
    tb = min(tile_batch, max(vmem_budget // bytes_per_row, 8))
    tb = max(8, (tb // 8) * 8)
    tb = min(tb, _round_up(B, 8))                   # don't over-tile tiny batches
    if B > 8:
        # keep >= 2 batch blocks so the v7x megacore can shard the grid
        tb = min(tb, _round_up((B + 1) // 2, 8))
    Bp = _round_up(B, tb)

    # ---- index construction + flat gather (XLA) -----------------------------
    # Pad the tiny int32 index tensor (kilobytes) instead of the gathered data.
    idx = x_idx.astype(jnp.int32) + offsets[None, :].astype(jnp.int32)  # (B, F)
    if Bp != B:
        idx = jnp.pad(idx, ((0, Bp - B), (0, 0)))

    pi = jnp.asarray(pair_i + [0] * (P_pad - P), dtype=jnp.int32)
    pj = jnp.asarray(pair_j + [0] * (P_pad - P), dtype=jnp.int32)
    # pair p = (i, j):
    #   left  = emb_j(field i)  -> flat row  j*V + idx[:, i]
    #   right = emb_i(field j)  -> flat row  i*V + idx[:, j]
    left_rows = idx[:, pi] + pj[None, :] * V        # (Bp, P_pad)
    right_rows = idx[:, pj] + pi[None, :] * V       # (Bp, P_pad)

    tables_flat = tables.reshape(F * V, E)
    # TODO(synk): when F*V*E*itemsize fits comfortably in VMEM, move this gather
    # in-kernel (whole-table VMEM operand + per-tile (tb, P_pad) int32 rows) and
    # drop the (Bp, Wp) HBM intermediates entirely.
    left = jnp.take(tables_flat, left_rows, axis=0).reshape(Bp, Wp)
    right = jnp.take(tables_flat, right_rows, axis=0).reshape(Bp, Wp)

    # ---- Pallas: lane-dense elementwise product over batch tiles ------------
    out_flat = pl.pallas_call(
        _ffm_pair_mul_kernel,
        out_shape=jax.ShapeDtypeStruct((Bp, Wp), tables.dtype),
        grid_spec=pltpu.PrefetchScalarGridSpec(
            num_scalar_prefetch=0,
            grid=(Bp // tb,),
            in_specs=[
                pl.BlockSpec((tb, Wp), lambda b: (b, 0)),
                pl.BlockSpec((tb, Wp), lambda b: (b, 0)),
            ],
            out_specs=pl.BlockSpec((tb, Wp), lambda b: (b, 0)),
        ),
        compiler_params=pltpu.CompilerParams(
            dimension_semantics=("parallel",),      # megacore-shardable batch axis
            vmem_limit_bytes=vmem_limit,
        ),
        cost_estimate=pl.CostEstimate(
            flops=Bp * Wp,
            transcendentals=0,
            bytes_accessed=3 * Bp * Wp * itemsize,
        ),
    )(left, right)

    return out_flat[:B, :P * E].reshape(B, P, E)


def field_aware_fm_ref(x_idx, tables, offsets):
    """Pure-JAX reference matching the PyTorch forward."""
    B, F = x_idx.shape
    idx = x_idx + offsets[None, :]
    xs = [tables[t][idx] for t in range(F)]         # each (B, F, E)
    ix = []
    for i in range(F - 1):
        for j in range(i + 1, F):
            ix.append(xs[j][:, i] * xs[i][:, j])
    return jnp.stack(ix, axis=1)                    # (B, P, E)


if __name__ == "__main__":
    key = jax.random.PRNGKey(0)
    field_dims = (10, 12, 7, 5)                     # 4 fields, total vocab 34
    embed_dim = 16
    batch = 32
    F = len(field_dims)
    V = sum(field_dims)

    k_idx, k_emb = jax.random.split(key)

    # raw per-field indices in [0, field_dims[f])
    x_idx = jax.random.randint(k_idx, (batch, F), 0,
                               jnp.asarray(field_dims, dtype=jnp.int32))

    # Xavier-uniform init like the PyTorch module: U(-a, a), a = sqrt(6/(V+E))
    a = (6.0 / (V + embed_dim)) ** 0.5
    tables = jax.random.uniform(k_emb, (F, V, embed_dim), dtype=jnp.float32,
                                minval=-a, maxval=a)

    offs = [0]
    for d in field_dims[:-1]:
        offs.append(offs[-1] + d)
    offsets = jnp.asarray(offs, dtype=jnp.int32)

    out = field_aware_fm(x_idx, tables, offsets)
    out = jax.block_until_ready(out)

    ref = field_aware_fm_ref(x_idx, tables, offsets)
    assert out.shape == (batch, F * (F - 1) // 2, embed_dim)
    assert jnp.allclose(out, ref, atol=1e-5, rtol=1e-5), "mismatch vs reference"
    print("KERNEL_OK")
</pallas_src>

<mosaic_0001>
module attributes {stable_mosaic.version = 11 : i64} {
  func.func @_ffm_pair_mul_kernel(%arg0: i32, %arg1: memref<16x128xf32, #tpu.memory_space<vmem>>, %arg2: memref<16x128xf32, #tpu.memory_space<vmem>>, %arg3: memref<16x128xf32, #tpu.memory_space<vmem>>) attributes {dimension_semantics = [#tpu.dimension_semantics<parallel>], iteration_bounds = array<i64: 2>, scalar_prefetch = 0 : i64, scratch_operands = 0 : i64, tpu.core_type = #tpu.core_type<tc>, window_params = [{transform_indices = @transform_0, window_bounds = array<i64: 16, 128>}, {transform_indices = @transform_1, window_bounds = array<i64: 16, 128>}, {transform_indices = @transform_2, window_bounds = array<i64: 16, 128>}]} {
    %c0 = arith.constant 0 : index
    %c0_0 = arith.constant 0 : index
    %0 = vector.load %arg1[%c0, %c0_0] : memref<16x128xf32, #tpu.memory_space<vmem>>, vector<16x128xf32>
    %c0_1 = arith.constant 0 : index
    %c0_2 = arith.constant 0 : index
    %1 = vector.load %arg2[%c0_1, %c0_2] : memref<16x128xf32, #tpu.memory_space<vmem>>, vector<16x128xf32>
    %2 = arith.mulf %0, %1 : vector<16x128xf32>
    %c0_3 = arith.constant 0 : index
    %c0_4 = arith.constant 0 : index
    %3 = vector.load %arg3[%c0_3, %c0_4] : memref<16x128xf32, #tpu.memory_space<vmem>>, vector<16x128xf32>
    tpu.vector_store %arg3[%c0_3, %c0_4], %2 {strides = array<i32>} : memref<16x128xf32, #tpu.memory_space<vmem>>, vector<16x128xf32>,
    return
  }
  func.func @transform_0(%arg0: i32) -> (i32, i32) {
    %c0_i32 = arith.constant 0 : i32
    %c0_i32_0 = arith.constant 0 : i32
    return %arg0, %c0_i32 : i32, i32
  }
  func.func @transform_1(%arg0: i32) -> (i32, i32) {
    %c0_i32 = arith.constant 0 : i32
    %c0_i32_0 = arith.constant 0 : i32
    return %arg0, %c0_i32 : i32, i32
  }
  func.func @transform_2(%arg0: i32) -> (i32, i32) {
    %c0_i32 = arith.constant 0 : i32
    %c0_i32_0 = arith.constant 0 : i32
    return %arg0, %c0_i32 : i32, i32
  }
}

</mosaic_0001>

<llo_original>
// kernel: tpu_custom_call.1
$region0: #{tpu_custom_call.1}
  #allocation0 [shape = 'u32[]', space=smem, size = 0x4, offset = 0x4, fixed_abs, tag = 'smem constant byte address 0x4 - core index']
  #allocation1 [shape = 'u32[144,128]{1,0:T(1,128)}', space=vmem, size = 0x12000, scoped, tag = 'internal scratch']
  %s0 = inlined_call_operand.hbm [shape: f32[32,128], index: 0, kind: input, shape index: {}]
  %s1 = inlined_call_operand.hbm [shape: f32[32,128], index: 1, kind: input, shape index: {}]
  %s2 = inlined_call_operand.hbm [shape: f32[32,128], index: 2, kind: output, shape index: {}]
  %s3 = sld [smem:[#allocation0]]
  $region49: #{tpu_custom_call.1} parent=0
    _
  %s5 = ssub.s32 1, %s3
  %s6 = scalar_select 0, %s5, %s3
  $region1: #{tpu_custom_call.1} parent=0
    #allocation2 [shape = 'u8[16384]{0}', space=vmem, size = 0x4000, scoped, tag = 'input window, operand 0']
    #allocation3 [shape = 's32[2]{0}', space=sflag, size = 0x8, scoped, tag = 'scoped memory for tpu_custom_call.1']
    #allocation4 [shape = 's32[2]{0}', space=sflag, size = 0x8, scoped, tag = 'scoped memory for tpu_custom_call.1']
    #allocation5 [shape = 'u8[16384]{0}', space=vmem, size = 0x4000, scoped, tag = 'input window, operand 1']
    #allocation6 [shape = 's32[2]{0}', space=sflag, size = 0x8, scoped, tag = 'scoped memory for tpu_custom_call.1']
    #allocation7 [shape = 'u8[16384]{0}', space=vmem, size = 0x4000, scoped, tag = 'output window, operand 0']
    %7 = vsyncpa [#allocation3], 0
    %s8 = scalar_lea.sflag [#allocation3], 1
    %9 = vsyncpa %s8, 0
    %10 = vsyncpa [#allocation6], 0
    %s11 = scalar_lea.sflag [#allocation6], 1
    %12 = vsyncpa %s11, 0
    %13 = vsyncpa [#allocation4], 0
    %s14 = scalar_lea.sflag [#allocation4], 1
    %15 = vsyncpa %s14, 0
    loop: start=0, step=1, limit=4
    $region2: #{tpu_custom_call.1} parent=1 // loop_pre_header
      _
    $region3: #{tpu_custom_call.1} parent=1 // loop_header
      %s17 = sphi 0, %s21
      %p18 = scmp.ge.s32.totalorder %s17, 4
      %s27 = sphi 0, %s29
      %s30 = sphi 0, %s27
      %s31 = sphi 0, %s30
      %s47 = sphi 0, %s31
      %s53 = sphi 0, %s55
      %s56 = sphi 0, %s53
      %s57 = sphi 0, %s56
      %s73 = sphi 0, %s57
      %s79 = sphi 0, %s81
      %s82 = sphi 0, %s79
      %s83 = sphi 0, %s82
      %s99 = sphi 0, %s83
    $region4: #{tpu_custom_call.1} parent=1 // loop_header_branch
      %20 = sbr.rel (%p18) target = $region8
    $region5: #{tpu_custom_call.1} parent=1 // loop_body
      %s22 = ssub.s32 %s17, 1
      %s23 = ssub.s32 %s17, 2
      %s24 = sadd.s32 %s17, 1
      %s25 = ssub.s32 %s17, %s24
      %p26 = scmp.eq.s32.totalorder %s25, 0
      %s28 = sadd.s32 %s27, 1
      %s29 = scalar_select %p26, %s27, %s28
      %p32 = pneg %p26
      %p33 = scmp.eq.s32.totalorder %s17, 1
      %p34 = por %p32, %p33
      %p35 = scmp.ne.s32.totalorder %s27, %s30
      %p36 = scmp.eq.s32.totalorder %s17, 0
      %p37 = por %p35, %p36
      %p38 = scmp.ne.s32.totalorder %s27, %s30
      %p39 = scmp.eq.s32.totalorder %s22, 1
      %p40 = por %p38, %p39
      %p41 = scmp.ne.s32.totalorder %s30, %s31
      %p42 = scmp.eq.s32.totalorder %s22, 0
      %p43 = por %p41, %p42
      %p44 = scmp.ne.s32.totalorder %s30, %s31
      %p45 = scmp.eq.s32.totalorder %s23, 1
      %p46 = por %p44, %p45
      %p48 = scmp.ne.s32.totalorder %s31, %s47
      %p49 = scmp.eq.s32.totalorder %s23, 0
      %p50 = por %p48, %p49
      %s51 = ssub.s32 %s17, %s24
      %p52 = scmp.eq.s32.totalorder %s51, 0
      %s54 = sadd.s32 %s53, 1
      %s55 = scalar_select %p52, %s53, %s54
      %p58 = pneg %p52
      %p59 = scmp.eq.s32.totalorder %s17, 1
      %p60 = por %p58, %p59
      %p61 = scmp.ne.s32.totalorder %s53, %s56
      %p62 = scmp.eq.s32.totalorder %s17, 0
      %p63 = por %p61, %p62
      %p64 = scmp.ne.s32.totalorder %s53, %s56
      %p65 = scmp.eq.s32.totalorder %s22, 1
      %p66 = por %p64, %p65
      %p67 = scmp.ne.s32.totalorder %s56, %s57
      %p68 = scmp.eq.s32.totalorder %s22, 0
      %p69 = por %p67, %p68
      %p70 = scmp.ne.s32.totalorder %s56, %s57
      %p71 = scmp.eq.s32.totalorder %s23, 1
      %p72 = por %p70, %p71
      %p74 = scmp.ne.s32.totalorder %s57, %s73
      %p75 = scmp.eq.s32.totalorder %s23, 0
      %p76 = por %p74, %p75
      %s77 = ssub.s32 %s17, %s24
      %p78 = scmp.eq.s32.totalorder %s77, 0
      %s80 = sadd.s32 %s79, 1
      %s81 = scalar_select %p78, %s79, %s80
      %p84 = pneg %p78
      %p85 = scmp.eq.s32.totalorder %s17, 1
      %p86 = por %p84, %p85
      %p87 = scmp.ne.s32.totalorder %s79, %s82
      %p88 = scmp.eq.s32.totalorder %s17, 0
      %p89 = por %p87, %p88
      %p90 = scmp.ne.s32.totalorder %s79, %s82
      %p91 = scmp.eq.s32.totalorder %s22, 1
      %p92 = por %p90, %p91
      %p93 = scmp.ne.s32.totalorder %s82, %s83
      %p94 = scmp.eq.s32.totalorder %s22, 0
      %p95 = por %p93, %p94
      %p96 = scmp.ne.s32.totalorder %s82, %s83
      %p97 = scmp.eq.s32.totalorder %s23, 1
      %p98 = por %p96, %p97
      %p100 = scmp.ne.s32.totalorder %s83, %s99
      %p101 = scmp.eq.s32.totalorder %s23, 0
      %p102 = por %p100, %p101
      %p103 = scmp.le.s32.totalorder 1, %s17
      %p104 = scmp.lt.s32.totalorder %s17, 3
      %p105 = pnand %p103, %p104
      %p106 = pneg %p105
      // Predicated region
      $region9: #{tpu_custom_call.1} parent=5 // pred_check
        _
      $region10: #{tpu_custom_call.1} parent=5 // pred_check_branch
        %108 = sbr.rel (%p105) target = $region12
      $region11: #{tpu_custom_call.1} parent=5 // pred_region
        %s109 = ssub.s32 %s17, 1
      $region12: #{tpu_custom_call.1} parent=5 // pred_fallthru
        _
      %p110 = scmp.lt.s32.totalorder %s17, 2
      // Predicated region
      $region13: #{tpu_custom_call.1} parent=5 // pred_check
        %p111 = pneg %p110
      $region14: #{tpu_custom_call.1} parent=5 // pred_check_branch
        %113 = sbr.rel (%p111) target = $region16
      $region15: #{tpu_custom_call.1} parent=5 // pred_region
        // Predicated region
        $region17: #{tpu_custom_call.1} parent=15 // pred_check
          %p114 = pneg %p37
        $region18: #{tpu_custom_call.1} parent=15 // pred_check_branch
          %116 = sbr.rel (%p114) target = $region20
        $region19: #{tpu_custom_call.1} parent=15 // pred_region
          %s117 = sand.u32 %s27, 1
          %s118 = scalar_lea.sflag [#allocation3], %s117
          %s119 = sand.u32 %s27, 1
          %s120 = smul.addr %s119, 16
          %s121 = scalar_lea.vmem [#allocation2], %s120
          %s122 = smul.u32 2, %s17
          %s124 = ssub.s32 256, 256
          %125 = vsyncadd %s118, %s124
          %s126 = smul.addr %s122, 128
          %s127 = scalar_lea.hbm %s0, %s126
          %s128 = sshll.u32 %s121, 4
          %s129 = int_to_ptr.vmem [resolvable:$true] %s128
          %134 = dma.hbm_to_vmem [thread:$0]  %s127, 256, %s129, %s118, 128, 128, 8
        $region20: #{tpu_custom_call.1} parent=15 // pred_fallthru
          _
        // Predicated region
        $region21: #{tpu_custom_call.1} parent=15 // pred_check
          %p135 = pneg %p63
        $region22: #{tpu_custom_call.1} parent=15 // pred_check_branch
          %137 = sbr.rel (%p135) target = $region24
        $region23: #{tpu_custom_call.1} parent=15 // pred_region
          %s138 = sand.u32 %s53, 1
          %s139 = scalar_lea.sflag [#allocation6], %s138
          %s140 = sand.u32 %s53, 1
          %s141 = smul.addr %s140, 16
          %s142 = scalar_lea.vmem [#allocation5], %s141
          %s143 = smul.u32 2, %s17
          %s145 = ssub.s32 256, 256
          %146 = vsyncadd %s139, %s145
          %s147 = smul.addr %s143, 128
          %s148 = scalar_lea.hbm %s1, %s147
          %s149 = sshll.u32 %s142, 4
          %s150 = int_to_ptr.vmem [resolvable:$true] %s149
          %155 = dma.hbm_to_vmem [thread:$0]  %s148, 256, %s150, %s139, 128, 128, 8
        $region24: #{tpu_custom_call.1} parent=15 // pred_fallthru
          _
      $region16: #{tpu_custom_call.1} parent=5 // pred_fallthru
        _
      %p156 = scmp.le.s32.totalorder 1, %s17
      %p157 = scmp.lt.s32.totalorder %s17, 3
      %p158 = pnand %p156, %p157
      %p159 = pneg %p158
      // Predicated region
      $region25: #{tpu_custom_call.1} parent=5 // pred_check
        _
      $region26: #{tpu_custom_call.1} parent=5 // pred_check_branch
        %161 = sbr.rel (%p158) target = $region28
      $region27: #{tpu_custom_call.1} parent=5 // pred_region
        %s162 = ssub.s32 %s17, 1
        %s163 = sand.u32 %s30, 1
        %s164 = scalar_lea.sflag [#allocation3], %s163
        %s165 = sand.u32 %s30, 1
        %s166 = smul.addr %s165, 16
        %s167 = scalar_lea.vmem [#allocation2], %s166
        // Predicated region
        $region29: #{tpu_custom_call.1} parent=27 // pred_check
          %p168 = pneg %p43
        $region30: #{tpu_custom_call.1} parent=27 // pred_check_branch
          %170 = sbr.rel (%p168) target = $region32
        $region31: #{tpu_custom_call.1} parent=27 // pred_region
          %171 = dma.done %s164, 256
        $region32: #{tpu_custom_call.1} parent=27 // pred_fallthru
          _
        %s172 = sand.u32 %s56, 1
        %s173 = scalar_lea.sflag [#allocation6], %s172
        %s174 = sand.u32 %s56, 1
        %s175 = smul.addr %s174, 16
        %s176 = scalar_lea.vmem [#allocation5], %s175
        // Predicated region
        $region33: #{tpu_custom_call.1} parent=27 // pred_check
          %p177 = pneg %p69
        $region34: #{tpu_custom_call.1} parent=27 // pred_check_branch
          %179 = sbr.rel (%p177) target = $region36
        $region35: #{tpu_custom_call.1} parent=27 // pred_region
          %180 = dma.done %s173, 256
        $region36: #{tpu_custom_call.1} parent=27 // pred_fallthru
          _
        %s181 = sand.u32 %s30, 1
        %s182 = scalar_lea.sflag [#allocation3], %s181
        %s183 = sand.u32 %s30, 1
        %s184 = smul.addr %s183, 16
        %s185 = scalar_lea.vmem [#allocation2], %s184
        %p186 = pneg %p43
        %p187 = pneg %p40
        %s188 = sand.u32 %s56, 1
        %s189 = scalar_lea.sflag [#allocation6], %s188
        %s190 = sand.u32 %s56, 1
        %s191 = smul.addr %s190, 16
        %s192 = scalar_lea.vmem [#allocation5], %s191
        %p193 = pneg %p69
        %p194 = pneg %p66
        %p195 = pneg %p95
        %p196 = pneg %p92
        %s197 = sand.u32 %s82, 1
        %s198 = scalar_lea.sflag [#allocation4], %s197
        %s199 = sand.u32 %s82, 1
        %s200 = smul.addr %s199, 16
        %s201 = scalar_lea.vmem [#allocation7], %s200
        %s202 = smul.u32 2, %s22
        %s203 = smul.u32 2, %s22
        %s204 = smul.u32 2, %s22
        %v205 = vld [vmem:[%s167] sm:$0xff]
        %v206 = vld [vmem:[%s167 + $0x8] sm:$0xff]
        %v207 = vld [vmem:[%s176] sm:$0xff]
        %v208 = vld [vmem:[%s176 + $0x8] sm:$0xff]
        %v209 = vmul.f32 %v205, %v207
        %v210 = vmul.f32 %v206, %v208
        %211 = vst [vmem:[%s201] sm:$0xff] %v209
        %212 = vst [vmem:[%s201 + $0x8] sm:$0xff] %v210
        %s213 = sand.u32 %s82, 1
        %s214 = scalar_lea.sflag [#allocation4], %s213
        %s215 = sand.u32 %s82, 1
        %s216 = smul.addr %s215, 16
        %s217 = scalar_lea.vmem [#allocation7], %s216
        // Predicated region
        $region37: #{tpu_custom_call.1} parent=27 // pred_check
          %p218 = pneg %p92
        $region38: #{tpu_custom_call.1} parent=27 // pred_check_branch
          %220 = sbr.rel (%p218) target = $region40
        $region39: #{tpu_custom_call.1} parent=27 // pred_region
          %s221 = smul.u32 2, %s22
          %s223 = ssub.s32 256, 256
          %224 = vsyncadd %s214, %s223
          %s225 = smul.addr %s221, 128
          %s226 = scalar_lea.hbm %s2, %s225
          %s227 = sshll.u32 %s217, 4
          %s228 = int_to_ptr.vmem [resolvable:$true] %s227
          %233 = dma.vmem_to_hbm [thread:$0]  %s228, 256, %s226, %s214, 128, 128, 8
        $region40: #{tpu_custom_call.1} parent=27 // pred_fallthru
          _
      $region28: #{tpu_custom_call.1} parent=5 // pred_fallthru
        _
      %p234 = scmp.le.s32.totalorder 2, %s17
      // Predicated region
      $region41: #{tpu_custom_call.1} parent=5 // pred_check
        %p235 = pneg %p234
      $region42: #{tpu_custom_call.1} parent=5 // pred_check_branch
        %237 = sbr.rel (%p235) target = $region44
      $region43: #{tpu_custom_call.1} parent=5 // pred_region
        %s238 = ssub.s32 %s17, 2
        // Predicated region
        $region45: #{tpu_custom_call.1} parent=43 // pred_check
          %p239 = pneg %p98
        $region46: #{tpu_custom_call.1} parent=43 // pred_check_branch
          %241 = sbr.rel (%p239) target = $region48
        $region47: #{tpu_custom_call.1} parent=43 // pred_region
          %s242 = sand.u32 %s83, 1
          %s243 = scalar_lea.sflag [#allocation4], %s242
          %s244 = sand.u32 %s83, 1
          %s245 = smul.addr %s244, 16
          %s246 = scalar_lea.vmem [#allocation7], %s245
          %247 = dma.done %s243, 256
        $region48: #{tpu_custom_call.1} parent=43 // pred_fallthru
          _
      $region44: #{tpu_custom_call.1} parent=5 // pred_fallthru
        _
    $region6: #{tpu_custom_call.1} parent=1 // loop_footer
      %s21 = sadd.s32 1, %s17
    $region7: #{tpu_custom_call.1} parent=1 // loop_footer_branch
      %16 = sbr.rel target = $region3
    $region8: #{tpu_custom_call.1} parent=1 // loop_exit
      _
    %248 = vsyncpa [#allocation3], 1
    %s249 = scalar_lea.sflag [#allocation3], 1
    %250 = vsyncpa %s249, 1
    %251 = vsyncpa [#allocation6], 1
    %s252 = scalar_lea.sflag [#allocation6], 1
    %253 = vsyncpa %s252, 1
    %254 = vsyncpa [#allocation4], 1
    %s255 = scalar_lea.sflag [#allocation4], 1
    %256 = vsyncpa %s255, 1

</llo_original>
